<compile_context>
chip_gen: v6e
topology: v6e:2x2x1
jax: 0.10.0
libtpu: 0.0.40
codegen_flags: <defaults>
</compile_context>

<pallas_src>
import functools

import jax
import jax.numpy as jnp
from jax import lax
from jax.experimental import pallas as pl
from jax.experimental.pallas import tpu as pltpu


def _gpc_seq_kernel(t0_ref, ABt_ref, Wfull_ref, nhaug_ref, x_ref,
                    act_ref, Wout_ref, nhout_ref,
                    *, ds, da, H, HH, lr_scale, decay):
    f32 = jnp.float32
    step = pl.program_id(0)

    # Carried controller state lives in the resident output blocks (constant
    # index_map => stays in VMEM across all grid steps, HBM writeback at the
    # end).  Initialize from the (HBM-aliased) inputs on the first step.
    @pl.when(step == 0)
    def _():
        Wout_ref[...] = Wfull_ref[...]
        nhout_ref[...] = nhaug_ref[...]

    x = x_ref[0]                              # (1, ds) current state (row)

    # Augmented history buffer (lanes): [ state_slot | n_0 | ... | n_{H+HH-1} ]
    # state_slot holds x_{t-1} (previous state) at the top of every step.
    old = nhout_ref[...]                      # snapshot before any writes
    xp = old[:, 0:ds]                         # previous state (row)
    Wfull = Wout_ref[...]                     # (da, (H+1)*ds) = [-K | M_0..M_{H-1}]

    # ---- get_action: act = -K x + sum_h M_h n_h -----------------------------
    # TODO(synk): the original torch.tensordot contracts M (size H) with the
    # full noise_history (size H+HH) -- a shape mismatch in PyTorch; we contract
    # with the first H noise entries (the evident intent).
    # Build [x | n_0..n_{H-1}] via store + contiguous read-back (no lane concat),
    # then one VPU multiply + one lane reduce (K fused into Wfull).
    nhout_ref[:, 0:ds] = x
    vec1 = nhout_ref[:, 0:(H + 1) * ds]
    act = jnp.sum(Wfull * vec1, axis=1, keepdims=True)          # (da, 1)
    act_ref[0] = act

    # ---- update: noise = x - A xp - B act  (lane-dense rows) ----------------
    AT = ABt_ref[0:ds, :]                     # (ds, ds) = A^T
    BT = ABt_ref[ds:, :]                      # (da, ds) = B^T
    noise = (x - jnp.dot(xp, AT, preferred_element_type=f32)
               - jnp.sum(BT * act, axis=0, keepdims=True))      # (1, ds)

    # noise_history <- roll(-1, dim 0); [0] <- noise.  Write the rolled history
    # in place; temporarily restore xp to the state slot so [xp | new_nh_head]
    # can be read back contiguously for the gradient pass.
    nhout_ref[:, 0:ds] = xp
    nhout_ref[:, ds:2 * ds] = noise
    if H + HH > 2:
        nhout_ref[:, 2 * ds:(H + HH) * ds] = old[:, 3 * ds:]
    nhout_ref[:, (H + HH) * ds:] = old[:, ds:2 * ds]

    # ---- gradient step on M ---------------------------------------------------
    # TODO(synk): original calls loss.backward() on an M with requires_grad=False
    # (M.grad would be None); the analytic gradient is used instead, and the
    # undefined `self.bias -= lr * None` line is dropped.
    vec2 = nhout_ref[:, 0:(H + 1) * ds]                          # [xp | new nh head]
    act2 = jnp.sum(Wfull * vec2, axis=1, keepdims=True)         # (da, 1)

    t = t0_ref[0] + step
    if decay:
        lr = lr_scale / (t.astype(f32) + 1.0)
    else:
        lr = lr_scale

    # dL/dM[h][a,d] = 2 * act2[a] * new_nh[h][d]; mask the -K lanes so the update
    # is one full-tile store (K columns get subtracted by exactly zero).
    lane = lax.broadcasted_iota(jnp.int32, (1, (H + 1) * ds), 1)
    gvec = jnp.where(lane >= ds, vec2, 0.0)
    Wout_ref[...] = Wfull - (2.0 * lr) * (act2 * gvec)

    # Current state becomes next step's xp.
    nhout_ref[:, 0:ds] = x


def make_gpc_call(T, ds, da, H, HH, lr_scale, decay):
    """One pallas_call covering a T-step rollout (T=1 == closed-loop step)."""
    kern = functools.partial(_gpc_seq_kernel, ds=ds, da=da, H=H, HH=HH,
                             lr_scale=float(lr_scale), decay=bool(decay))
    W_width = (H + 1) * ds
    nh_width = (1 + H + HH) * ds

    call = pl.pallas_call(
        kern,
        grid=(T,),
        in_specs=[
            pl.BlockSpec((1,), lambda t: (0,),
                         memory_space=pltpu.MemorySpace.SMEM),       # t0 (scalar)
            pl.BlockSpec((ds + da, ds), lambda t: (0, 0)),           # [A^T ; B^T]
            pl.BlockSpec((da, W_width), lambda t: (0, 0)),           # Wfull
            pl.BlockSpec((1, nh_width), lambda t: (0, 0)),           # [xprev | nh]
            pl.BlockSpec((1, 1, ds), lambda t: (t, 0, 0)),           # states
        ],
        out_specs=(
            pl.BlockSpec((1, da, 1), lambda t: (t, 0, 0)),           # actions
            pl.BlockSpec((da, W_width), lambda t: (0, 0)),           # new Wfull (resident)
            pl.BlockSpec((1, nh_width), lambda t: (0, 0)),           # new [x | nh] (resident)
        ),
        out_shape=(
            jax.ShapeDtypeStruct((T, da, 1), jnp.float32),
            jax.ShapeDtypeStruct((da, W_width), jnp.float32),
            jax.ShapeDtypeStruct((1, nh_width), jnp.float32),
        ),
        input_output_aliases={2: 1, 3: 2},
        compiler_params=pltpu.CompilerParams(
            dimension_semantics=("arbitrary",)),
    )

    def run(t0, ABt, Wfull, nhaug, states):
        actions, Wfull_new, nhaug_new = call(t0, ABt, Wfull, nhaug, states)
        return actions, Wfull_new, nhaug_new, t0 + T

    # Donate the carried state so the pallas-level aliasing is truly in place.
    return jax.jit(run, donate_argnums=(2, 3))


class GPC:
    """JAX/Pallas port of GPC_OLD (functional state carried on the Python object)."""

    def __init__(self, A, B, Q=None, R=None, K=None, start_time=0, cost_fn=None,
                 H=3, HH=2, lr_scale=0.005, decay=True):
        # TODO(synk): original falls back to K = lqr(A, B, Q, R); `lqr` is not
        # defined in the source file, so K must be provided here.
        assert K is not None, "K must be provided (lqr() is undefined in the source)"
        assert HH >= 1, "kernel roll/slice logic assumes HH >= 1"
        d_state, d_action = B.shape
        self.d_state, self.d_action = d_state, d_action
        self.H, self.HH = H, HH
        self.lr_scale, self.decay = lr_scale, decay
        self.t = 0

        f32 = jnp.float32
        self.A = jnp.asarray(A, f32)
        self.B = jnp.asarray(B, f32)
        self.K = jnp.asarray(K, f32)

        # Kernel-internal, lane-dense layouts.
        self._ABt = jnp.concatenate([self.A.T, self.B.T], axis=0)        # (ds+da, ds)
        self._Wfull = jnp.concatenate(
            [-self.K, jnp.zeros((d_action, H * d_state), f32)], axis=1)  # [-K | M...]
        self._nhaug = jnp.zeros((1, (1 + H + HH) * d_state), f32)        # [xprev | nh]
        self._t0 = jnp.zeros((1,), jnp.int32)

        self.state = jnp.zeros((d_state, 1), f32)
        self.action = jnp.zeros((d_action, 1), f32)
        self._calls = {}

    def _get_call(self, T):
        fn = self._calls.get(T)
        if fn is None:
            fn = make_gpc_call(T, self.d_state, self.d_action, self.H, self.HH,
                               self.lr_scale, self.decay)
            self._calls[T] = fn
        return fn

    # External views in the original PyTorch layouts.
    @property
    def M(self):                                     # (H, d_action, d_state)
        ds, da, H = self.d_state, self.d_action, self.H
        return jnp.transpose(self._Wfull[:, ds:].reshape(da, H, ds), (1, 0, 2))

    @property
    def noise_history(self):                         # (H+HH, d_state, 1)
        return self._nhaug[:, self.d_state:].reshape(self.H + self.HH, self.d_state, 1)

    def forward(self, state):
        """state: (d_state, 1) column; returns action: (d_action, 1) column."""
        actions = self.forward_sequence(
            jnp.asarray(state, jnp.float32).reshape(1, self.d_state, 1))
        return actions[0]

    def forward_sequence(self, states):
        """states: (T, d_state, 1); runs the whole rollout in ONE kernel launch."""
        states = jnp.asarray(states, jnp.float32)
        T = states.shape[0]
        states_rows = states.reshape(T, 1, self.d_state)     # lane-dense rows
        call = self._get_call(T)
        actions, self._Wfull, self._nhaug, self._t0 = call(
            self._t0, self._ABt, self._Wfull, self._nhaug, states_rows)
        self.t += T
        self.state = states[-1].reshape(self.d_state, 1)
        self.action = actions[-1]
        return actions                                        # (T, d_action, 1)


# ----------------------------- pure-JAX reference ------------------------------
def _reference_step(lr, A, B, K, M, nh, xprev, x):
    H = M.shape[0]
    act = -K @ x + jnp.einsum('hij,hjk->ik', M, nh[:H])
    noise = x - A @ xprev - B @ act
    new_nh = jnp.roll(nh, shift=-1, axis=0).at[0].set(noise)
    act2 = -K @ xprev + jnp.einsum('hij,hjk->ik', M, new_nh[:H])
    grad_M = 2.0 * jnp.einsum('ik,hjk->hij', act2, new_nh[:H])
    return act, M - lr * grad_M, new_nh


if __name__ == "__main__":
    d_state, d_action, H, HH = 8, 4, 3, 2
    key = jax.random.PRNGKey(0)
    kA, kB, kK, kx = jax.random.split(key, 4)

    A = 0.1 * jax.random.normal(kA, (d_state, d_state), jnp.float32)
    B = 0.1 * jax.random.normal(kB, (d_state, d_action), jnp.float32)
    K = 0.1 * jax.random.normal(kK, (d_action, d_state), jnp.float32)

    T = 6
    xs = jax.random.normal(kx, (T, d_state, 1), jnp.float32)

    # Path 1: per-step closed-loop API (one tiny launch per step).
    ctrl_step = GPC(A, B, K=K, H=H, HH=HH, lr_scale=0.005, decay=True)
    acts_step = jnp.stack([ctrl_step.forward(xs[i]) for i in range(T)], axis=0)

    # Path 2: full rollout amortized into ONE kernel launch (grid=(T,)).
    ctrl_seq = GPC(A, B, K=K, H=H, HH=HH, lr_scale=0.005, decay=True)
    acts_seq = ctrl_seq.forward_sequence(xs)
    jax.block_until_ready(acts_seq)

    # Pure-JAX reference in the original PyTorch layout.
    M_r = jnp.zeros((H, d_action, d_state), jnp.float32)
    nh_r = jnp.zeros((H + HH, d_state, 1), jnp.float32)
    xprev_r = jnp.zeros((d_state, 1), jnp.float32)
    refs = []
    for t in range(T):
        lr = 0.005 / (t + 1)
        a_r, M_r, nh_r = _reference_step(lr, A, B, K, M_r, nh_r, xprev_r, xs[t])
        xprev_r = xs[t]
        refs.append(a_r)
    refs = jnp.stack(refs, axis=0)

    assert jnp.allclose(acts_step, refs, atol=1e-5, rtol=1e-5)
    assert jnp.allclose(acts_seq, refs, atol=1e-5, rtol=1e-5)
    assert jnp.allclose(ctrl_step.M, M_r, atol=1e-5, rtol=1e-5)
    assert jnp.allclose(ctrl_seq.M, M_r, atol=1e-5, rtol=1e-5)
    assert jnp.allclose(ctrl_step.noise_history, nh_r, atol=1e-5, rtol=1e-5)
    assert jnp.allclose(ctrl_seq.noise_history, nh_r, atol=1e-5, rtol=1e-5)

    print("KERNEL_OK")
</pallas_src>

<mosaic_0001>
module attributes {stable_mosaic.version = 11 : i64} {
  func.func @_gpc_seq_kernel(%arg0: i32, %arg1: memref<1xi32, #tpu.memory_space<smem>>, %arg2: memref<12x8xf32, #tpu.memory_space<vmem>>, %arg3: memref<4x32xf32, #tpu.memory_space<vmem>>, %arg4: memref<1x48xf32, #tpu.memory_space<vmem>>, %arg5: memref<1x1x8xf32, #tpu.memory_space<vmem>>, %arg6: memref<1x4x1xf32, #tpu.memory_space<vmem>>, %arg7: memref<4x32xf32, #tpu.memory_space<vmem>>, %arg8: memref<1x48xf32, #tpu.memory_space<vmem>>) attributes {dimension_semantics = [#tpu.dimension_semantics<arbitrary>], iteration_bounds = array<i64: 1>, scalar_prefetch = 0 : i64, scratch_operands = 0 : i64, tpu.core_type = #tpu.core_type<tc>, window_params = [{transform_indices = @transform_0, window_bounds = array<i64: 1>}, {pipeline_mode = #tpu.pipeline_mode<synchronous>, transform_indices = @transform_1, window_bounds = array<i64: 12, 8>}, {pipeline_mode = #tpu.pipeline_mode<synchronous>, transform_indices = @transform_2, window_bounds = array<i64: 4, 32>}, {pipeline_mode = #tpu.pipeline_mode<synchronous>, transform_indices = @transform_3, window_bounds = array<i64: 1, 48>}, {transform_indices = @transform_4, window_bounds = array<i64: 1, 1, 8>}, {transform_indices = @transform_5, window_bounds = array<i64: 1, 4, 1>}, {pipeline_mode = #tpu.pipeline_mode<synchronous>, transform_indices = @transform_6, window_bounds = array<i64: 4, 32>}, {pipeline_mode = #tpu.pipeline_mode<synchronous>, transform_indices = @transform_7, window_bounds = array<i64: 1, 48>}]} {
    %c0_i32 = arith.constant 0 : i32
    %0 = arith.cmpi eq, %arg0, %c0_i32 : i32
    %1 = arith.extui %0 : i1 to i32
    %c0_i32_0 = arith.constant 0 : i32
    %2 = arith.cmpi ne, %1, %c0_i32_0 : i32
    scf.if %2 {
      %c0_37 = arith.constant 0 : index
      %c0_38 = arith.constant 0 : index
      %56 = vector.load %arg3[%c0_37, %c0_38] : memref<4x32xf32, #tpu.memory_space<vmem>>, vector<4x32xf32>
      %c0_39 = arith.constant 0 : index
      %c0_40 = arith.constant 0 : index
      %57 = vector.load %arg7[%c0_39, %c0_40] : memref<4x32xf32, #tpu.memory_space<vmem>>, vector<4x32xf32>
      tpu.vector_store %arg7[%c0_39, %c0_40], %56 {strides = array<i32>} : memref<4x32xf32, #tpu.memory_space<vmem>>, vector<4x32xf32>,
      %c0_41 = arith.constant 0 : index
      %c0_42 = arith.constant 0 : index
      %58 = vector.load %arg4[%c0_41, %c0_42] : memref<1x48xf32, #tpu.memory_space<vmem>>, vector<1x48xf32>
      %c0_43 = arith.constant 0 : index
      %c0_44 = arith.constant 0 : index
      %59 = vector.load %arg8[%c0_43, %c0_44] : memref<1x48xf32, #tpu.memory_space<vmem>>, vector<1x48xf32>
      tpu.vector_store %arg8[%c0_43, %c0_44], %58 {strides = array<i32>} : memref<1x48xf32, #tpu.memory_space<vmem>>, vector<1x48xf32>,
    } else {
    }
    %c0 = arith.constant 0 : index
    %c0_1 = arith.constant 0 : index
    %c0_2 = arith.constant 0 : index
    %3 = vector.load %arg5[%c0, %c0_1, %c0_2] : memref<1x1x8xf32, #tpu.memory_space<vmem>>, vector<1x1x8xf32>
    %4 = vector.shape_cast %3 : vector<1x1x8xf32> to vector<1x8xf32>
    %c0_3 = arith.constant 0 : index
    %c0_4 = arith.constant 0 : index
    %5 = vector.load %arg8[%c0_3, %c0_4] : memref<1x48xf32, #tpu.memory_space<vmem>>, vector<1x48xf32>
    %6 = vector.extract_strided_slice %5 {offsets = [0, 0], sizes = [1, 8], strides = [1, 1]} : vector<1x48xf32> to vector<1x8xf32>
    %c0_5 = arith.constant 0 : index
    %c0_6 = arith.constant 0 : index
    %7 = vector.load %arg7[%c0_5, %c0_6] : memref<4x32xf32, #tpu.memory_space<vmem>>, vector<4x32xf32>
    %c0_7 = arith.constant 0 : index
    %c0_8 = arith.constant 0 : index
    %8 = vector.load %arg8[%c0_7, %c0_8] : memref<1x48xf32, #tpu.memory_space<vmem>>, vector<1x8xf32>
    tpu.vector_store %arg8[%c0_7, %c0_8], %4 {strides = array<i32>} : memref<1x48xf32, #tpu.memory_space<vmem>>, vector<1x8xf32>,
    %c0_9 = arith.constant 0 : index
    %c0_10 = arith.constant 0 : index
    %9 = vector.load %arg8[%c0_9, %c0_10] : memref<1x48xf32, #tpu.memory_space<vmem>>, vector<1x32xf32>
    %10 = vector.broadcast %9 : vector<1x32xf32> to vector<4x32xf32>
    %11 = arith.mulf %7, %10 : vector<4x32xf32>
    %cst = arith.constant dense<0.000000e+00> : vector<4xf32>
    %12 = vector.multi_reduction <add>, %11, %cst [1] : vector<4x32xf32> to vector<4xf32>
    %13 = vector.shape_cast %12 : vector<4xf32> to vector<4x1xf32>
    %c0_11 = arith.constant 0 : index
    %c0_12 = arith.constant 0 : index
    %c0_13 = arith.constant 0 : index
    %14 = vector.load %arg6[%c0_11, %c0_12, %c0_13] : memref<1x4x1xf32, #tpu.memory_space<vmem>>, vector<1x4x1xf32>
    %15 = vector.shape_cast %14 : vector<1x4x1xf32> to vector<4x1xf32>
    %16 = vector.shape_cast %13 : vector<4x1xf32> to vector<1x4x1xf32>
    tpu.vector_store %arg6[%c0_11, %c0_12, %c0_13], %16 {strides = array<i32>} : memref<1x4x1xf32, #tpu.memory_space<vmem>>, vector<1x4x1xf32>,
    %c0_14 = arith.constant 0 : index
    %c0_15 = arith.constant 0 : index
    %17 = vector.load %arg2[%c0_14, %c0_15] : memref<12x8xf32, #tpu.memory_space<vmem>>, vector<8x8xf32>
    %c8 = arith.constant 8 : index
    %c0_16 = arith.constant 0 : index
    %18 = vector.load %arg2[%c8, %c0_16] : memref<12x8xf32, #tpu.memory_space<vmem>>, vector<4x8xf32>
    %cst_17 = arith.constant dense<0.000000e+00> : vector<1x8xf32>
    %19 = tpu.matmul %6, %17, %cst_17 {dimension_numbers = #tpu.dot_dimension_numbers<[1], [0], [0], [1], [0, 0, 1, 1], [], []>} : vector<1x8xf32>, vector<8x8xf32>, vector<1x8xf32> -> vector<1x8xf32>
    %20 = arith.subf %4, %19 : vector<1x8xf32>
    %21 = vector.broadcast %13 : vector<4x1xf32> to vector<4x8xf32>
    %22 = arith.mulf %18, %21 : vector<4x8xf32>
    %cst_18 = arith.constant dense<0.000000e+00> : vector<8xf32>
    %23 = vector.multi_reduction <add>, %22, %cst_18 [0] : vector<4x8xf32> to vector<8xf32>
    %24 = vector.shape_cast %23 : vector<8xf32> to vector<1x8xf32>
    %25 = arith.subf %20, %24 : vector<1x8xf32>
    %c0_19 = arith.constant 0 : index
    %c0_20 = arith.constant 0 : index
    %26 = vector.load %arg8[%c0_19, %c0_20] : memref<1x48xf32, #tpu.memory_space<vmem>>, vector<1x8xf32>
    tpu.vector_store %arg8[%c0_19, %c0_20], %6 {strides = array<i32>} : memref<1x48xf32, #tpu.memory_space<vmem>>, vector<1x8xf32>,
    %c0_21 = arith.constant 0 : index
    %c8_22 = arith.constant 8 : index
    %27 = vector.load %arg8[%c0_21, %c8_22] : memref<1x48xf32, #tpu.memory_space<vmem>>, vector<1x8xf32>
    tpu.vector_store %arg8[%c0_21, %c8_22], %25 {strides = array<i32>} : memref<1x48xf32, #tpu.memory_space<vmem>>, vector<1x8xf32>,
    %28 = vector.extract_strided_slice %5 {offsets = [0, 24], sizes = [1, 24], strides = [1, 1]} : vector<1x48xf32> to vector<1x24xf32>
    %c0_23 = arith.constant 0 : index
    %c16 = arith.constant 16 : index
    %29 = vector.load %arg8[%c0_23, %c16] : memref<1x48xf32, #tpu.memory_space<vmem>>, vector<1x24xf32>
    tpu.vector_store %arg8[%c0_23, %c16], %28 {strides = array<i32>} : memref<1x48xf32, #tpu.memory_space<vmem>>, vector<1x24xf32>,
    %30 = vector.extract_strided_slice %5 {offsets = [0, 8], sizes = [1, 8], strides = [1, 1]} : vector<1x48xf32> to vector<1x8xf32>
    %c0_24 = arith.constant 0 : index
    %c40 = arith.constant 40 : index
    %31 = vector.load %arg8[%c0_24, %c40] : memref<1x48xf32, #tpu.memory_space<vmem>>, vector<1x8xf32>
    tpu.vector_store %arg8[%c0_24, %c40], %30 {strides = array<i32>} : memref<1x48xf32, #tpu.memory_space<vmem>>, vector<1x8xf32>,
    %c0_25 = arith.constant 0 : index
    %c0_26 = arith.constant 0 : index
    %32 = vector.load %arg8[%c0_25, %c0_26] : memref<1x48xf32, #tpu.memory_space<vmem>>, vector<1x32xf32>
    %33 = vector.broadcast %32 : vector<1x32xf32> to vector<4x32xf32>
    %34 = arith.mulf %7, %33 : vector<4x32xf32>
    %cst_27 = arith.constant dense<0.000000e+00> : vector<4xf32>
    %35 = vector.multi_reduction <add>, %34, %cst_27 [1] : vector<4x32xf32> to vector<4xf32>
    %36 = vector.shape_cast %35 : vector<4xf32> to vector<4x1xf32>
    %c0_28 = arith.constant 0 : index
    %37 = memref.load %arg1[%c0_28] : memref<1xi32, #tpu.memory_space<smem>>
    %38 = arith.addi %37, %arg0 : i32
    %39 = arith.sitofp %38 : i32 to f32
    %cst_29 = arith.constant 1.000000e+00 : f32
    %40 = arith.addf %39, %cst_29 : f32
    %cst_30 = arith.constant 5.000000e-03 : f32
    %41 = arith.divf %cst_30, %40 : f32
    %42 = tpu.iota {dimensions = array<i32: 1>} : vector<1x32xi32>
    %c8_i32 = arith.constant 8 : i32
    %43 = vector.broadcast %c8_i32 : i32 to vector<1x32xi32>
    %44 = arith.cmpi sge, %42, %43 : vector<1x32xi32>
    %cst_31 = arith.constant 0.000000e+00 : f32
    %45 = vector.broadcast %cst_31 : f32 to vector<1x32xf32>
    %46 = arith.select %44, %32, %45 : vector<1x32xi1>, vector<1x32xf32>
    %cst_32 = arith.constant 2.000000e+00 : f32
    %47 = arith.mulf %cst_32, %41 : f32
    %48 = vector.broadcast %36 : vector<4x1xf32> to vector<4x32xf32>
    %49 = vector.broadcast %46 : vector<1x32xf32> to vector<4x32xf32>
    %50 = arith.mulf %48, %49 : vector<4x32xf32>
    %51 = vector.broadcast %47 : f32 to vector<4x32xf32>
    %52 = arith.mulf %51, %50 : vector<4x32xf32>
    %53 = arith.subf %7, %52 : vector<4x32xf32>
    %c0_33 = arith.constant 0 : index
    %c0_34 = arith.constant 0 : index
    %54 = vector.load %arg7[%c0_33, %c0_34] : memref<4x32xf32, #tpu.memory_space<vmem>>, vector<4x32xf32>
    tpu.vector_store %arg7[%c0_33, %c0_34], %53 {strides = array<i32>} : memref<4x32xf32, #tpu.memory_space<vmem>>, vector<4x32xf32>,
    %c0_35 = arith.constant 0 : index
    %c0_36 = arith.constant 0 : index
    %55 = vector.load %arg8[%c0_35, %c0_36] : memref<1x48xf32, #tpu.memory_space<vmem>>, vector<1x8xf32>
    tpu.vector_store %arg8[%c0_35, %c0_36], %4 {strides = array<i32>} : memref<1x48xf32, #tpu.memory_space<vmem>>, vector<1x8xf32>,
    return
  }
  func.func @transform_0(%arg0: i32) -> i32 {
    %c0_i32 = arith.constant 0 : i32
    %c0_i32_0 = arith.constant 0 : i32
    return %c0_i32 : i32
  }
  func.func @transform_1(%arg0: i32) -> (i32, i32) {
    %c0_i32 = arith.constant 0 : i32
    %c0_i32_0 = arith.constant 0 : i32
    %c0_i32_1 = arith.constant 0 : i32
    return %c0_i32, %c0_i32_0 : i32, i32
  }
  func.func @transform_2(%arg0: i32) -> (i32, i32) {
    %c0_i32 = arith.constant 0 : i32
    %c0_i32_0 = arith.constant 0 : i32
    %c0_i32_1 = arith.constant 0 : i32
    return %c0_i32, %c0_i32_0 : i32, i32
  }
  func.func @transform_3(%arg0: i32) -> (i32, i32) {
    %c0_i32 = arith.constant 0 : i32
    %c0_i32_0 = arith.constant 0 : i32
    %c0_i32_1 = arith.constant 0 : i32
    return %c0_i32, %c0_i32_0 : i32, i32
  }
  func.func @transform_4(%arg0: i32) -> (i32, i32, i32) {
    %c0_i32 = arith.constant 0 : i32
    %c0_i32_0 = arith.constant 0 : i32
    %c0_i32_1 = arith.constant 0 : i32
    return %arg0, %c0_i32, %c0_i32_0 : i32, i32, i32
  }
  func.func @transform_5(%arg0: i32) -> (i32, i32, i32) {
    %c0_i32 = arith.constant 0 : i32
    %c0_i32_0 = arith.constant 0 : i32
    %c0_i32_1 = arith.constant 0 : i32
    return %arg0, %c0_i32, %c0_i32_0 : i32, i32, i32
  }
  func.func @transform_6(%arg0: i32) -> (i32, i32) {
    %c0_i32 = arith.constant 0 : i32
    %c0_i32_0 = arith.constant 0 : i32
    %c0_i32_1 = arith.constant 0 : i32
    return %c0_i32, %c0_i32_0 : i32, i32
  }
  func.func @transform_7(%arg0: i32) -> (i32, i32) {
    %c0_i32 = arith.constant 0 : i32
    %c0_i32_0 = arith.constant 0 : i32
    %c0_i32_1 = arith.constant 0 : i32
    return %c0_i32, %c0_i32_0 : i32, i32
  }
}

</mosaic_0001>

<llo_original>
// kernel: run.1
$region0: #{run.1}
  #allocation0 [shape = 'u32[]', space=smem, size = 0x4, offset = 0x4, fixed_abs, tag = 'smem constant byte address 0x4 - core index']
  #allocation1 [shape = 'u32[144,128]{1,0:T(1,128)}', space=vmem, size = 0x12000, scoped, tag = 'internal scratch']
  #allocation2 [shape = 's32[1]{0:T(128)S(6)}', space=smem, size = 0x200, scoped, tag = 'scoped memory for run.1']
  %s0 = inlined_call_operand.<no memory space> [shape: s32[1], index: 0, kind: input, shape index: {}]
  %s1 = inlined_call_operand.vmem [shape: f32[12,8], index: 1, kind: input, shape index: {}]
  %s2 = inlined_call_operand.vmem [shape: f32[4,32], index: 2, kind: input, shape index: {}, may-alias: {2,6}]
  %s3 = inlined_call_operand.vmem [shape: f32[1,48], index: 3, kind: input, shape index: {}, may-alias: {3,7}]
  %s4 = inlined_call_operand.vmem [shape: f32[1,1,8], index: 4, kind: input, shape index: {}]
  %s5 = inlined_call_operand.vmem [shape: f32[1,4,1], index: 5, kind: output, shape index: {0}]
  %s6 = inlined_call_operand.vmem [shape: f32[4,32], index: 6, kind: output, shape index: {1}, may-alias: {2,6}]
  %s7 = inlined_call_operand.vmem [shape: f32[1,48], index: 7, kind: output, shape index: {2}, may-alias: {3,7}]
  %8 = xla_tuple %s5, %s6, %s7
  %s9 = sld [smem:[#allocation0]]
  $region50: #{run.1} parent=0
    _
  %s11 = ssub.s32 1, %s9
  %s12 = scalar_select 0, %s11, %s9
  %13 = sst [smem:[#allocation2]] %s0
  // Predicated region
  $region2: #{run.1} parent=0 // pred_check
    _
  $region3: #{run.1} parent=0 // pred_check_branch
    %15 = sbr.rel (0) target = $region5
  $region4: #{run.1} parent=0 // pred_region
    _
  $region5: #{run.1} parent=0 // pred_fallthru
    _
  // Predicated region
  $region6: #{run.1} parent=0 // pred_check
    _
  $region7: #{run.1} parent=0 // pred_check_branch
    %17 = sbr.rel (0) target = $region9
  $region8: #{run.1} parent=0 // pred_region
    _
  $region9: #{run.1} parent=0 // pred_fallthru
    _
  // Predicated region
  $region10: #{run.1} parent=0 // pred_check
    _
  $region11: #{run.1} parent=0 // pred_check_branch
    %19 = sbr.rel (0) target = $region13
  $region12: #{run.1} parent=0 // pred_region
    _
  $region13: #{run.1} parent=0 // pred_fallthru
    _
  // Predicated region
  $region14: #{run.1} parent=0 // pred_check
    _
  $region15: #{run.1} parent=0 // pred_check_branch
    %21 = sbr.rel (0) target = $region17
  $region16: #{run.1} parent=0 // pred_region
    _
  $region17: #{run.1} parent=0 // pred_fallthru
    _
  // Predicated region
  $region18: #{run.1} parent=0 // pred_check
    _
  $region19: #{run.1} parent=0 // pred_check_branch
    %23 = sbr.rel (0) target = $region21
  $region20: #{run.1} parent=0 // pred_region
    _
  $region21: #{run.1} parent=0 // pred_fallthru
    _
  %p24 = scmp.eq.s32.totalorder 0, 0
  // Predicated region
  $region22: #{run.1} parent=0 // pred_check
    %p25 = pneg %p24
  $region23: #{run.1} parent=0 // pred_check_branch
    %27 = sbr.rel (%p25) target = $region25
  $region24: #{run.1} parent=0 // pred_region
    %v28 = vld [vmem:[%s2] sm:$0xf]
    %vm29 = vcmask 257024
    %30 = vst.msk [vmem:[%s6] sm:$0xf] %vm29, %v28
    %v31 = vld [vmem:[%s3] sm:$0x1]
    %vm32 = vcmask 385024
    %33 = vst.msk [vmem:[%s7] sm:$0x1] %vm32, %v31
  $region25: #{run.1} parent=0 // pred_fallthru
    _
  %v34 = vld [vmem:[%s4] sm:$0x1]
  %v35 = vld [vmem:[%s7] sm:$0x1]
  %v36 = vld [vmem:[%s6] sm:$0xf]
  %vm37 = vcmask 57344
  %38 = vst.msk [vmem:[%s7] sm:$0x1] %vm37, %v34
  %v39 = vld [vmem:[%s7] sm:$0x1]
  %v41 = vlaneseq
  %v42 = vshrl.u32 %v41, 7
  %v43 = vsub.s32 0, %v42
  %v44 = vrot.slane %v39, %v43
  %v46 = vmul.f32 %v36, %v44
  %vm47 = vcmask 257024
  %v48 = vsel %vm47, %v46, 0.0
  %49 = vadd.xlane.f32.xlu0 %v48
  %v50 = vpop.xlane.xlu0 %49
  %vm51 = vcmask 3072
  %52 = vst.msk [vmem:[%s5] sm:$0xf] %vm51, %v50
  %v53 = vld [vmem:[%s1] sm:$0xff]
  %v54 = vld [vmem:[%s1 + $0x8] sm:$0xf]
  %vm55 = vcmask 64512
  %v57 = vsel %vm55, %v35, 0
  %59 = vmatprep.subr.mxu0 0.0
  %60 = vmatpush1.msra.mxu0 0.0
  %61 = vmatprep.subr.mxu0 0.0
  %62 = vmatpush1.msra.mxu0 0.0
  %63 = vmatprep.subr.mxu0 0.0
  %64 = vmatpush1.msra.mxu0 0.0
  %65 = vmatprep.subr.mxu0 0.0
  %66 = vmatpush1.msra.mxu0 0.0
  %67 = vmatprep.subr.mxu0 0.0
  %68 = vmatpush1.msra.mxu0 0.0
  %69 = vmatprep.subr.mxu0 0.0
  %70 = vmatpush1.msra.mxu0 0.0
  %71 = vmatprep.subr.mxu0 0.0
  %72 = vmatpush1.msra.mxu0 0.0
  %73 = vmatprep.subr.mxu0 0.0
  %74 = vmatpush1.msra.mxu0 0.0
  %75 = vmatprep.subr.mxu0 0.0
  %76 = vmatpush1.msra.mxu0 0.0
  %77 = vmatprep.subr.mxu0 0.0
  %78 = vmatpush1.msra.mxu0 0.0
  %79 = vmatprep.subr.mxu0 0.0
  %80 = vmatpush1.msra.mxu0 0.0
  %81 = vmatprep.subr.mxu0 0.0
  %82 = vmatpush1.msra.mxu0 0.0
  %83 = vmatprep.subr.mxu0 0.0
  %84 = vmatpush1.msra.mxu0 0.0
  %85 = vmatprep.subr.mxu0 0.0
  %86 = vmatpush1.msra.mxu0 0.0
  %87 = vmatprep.subr.mxu0 0.0
  %88 = vmatpush1.msra.mxu0 0.0
  %89 = vmatprep.subr.mxu0 0.0
  %90 = vmatpush1.msra.mxu0 %v53
  %91 = vmatprep.subr.mxu0 0.0
  %92 = vmatpush2.msra.mxu0 0.0
  %93 = vmatprep.subr.mxu0 0.0
  %94 = vmatpush2.msra.mxu0 0.0
  %95 = vmatprep.subr.mxu0 0.0
  %96 = vmatpush2.msra.mxu0 0.0
  %97 = vmatprep.subr.mxu0 0.0
  %98 = vmatpush2.msra.mxu0 0.0
  %99 = vmatprep.subr.mxu0 0.0
  %100 = vmatpush2.msra.mxu0 0.0
  %101 = vmatprep.subr.mxu0 0.0
  %102 = vmatpush2.msra.mxu0 0.0
  %103 = vmatprep.subr.mxu0 0.0
  %104 = vmatpush2.msra.mxu0 0.0
  %105 = vmatprep.subr.mxu0 0.0
  %106 = vmatpush2.msra.mxu0 0.0
  %107 = vmatprep.subr.mxu0 0.0
  %108 = vmatpush2.msra.mxu0 0.0
  %109 = vmatprep.subr.mxu0 0.0
  %110 = vmatpush2.msra.mxu0 0.0
  %111 = vmatprep.subr.mxu0 0.0
  %112 = vmatpush2.msra.mxu0 0.0
  %113 = vmatprep.subr.mxu0 0.0
  %114 = vmatpush2.msra.mxu0 0.0
  %115 = vmatprep.subr.mxu0 0.0
  %116 = vmatpush2.msra.mxu0 0.0
  %117 = vmatprep.subr.mxu0 0.0
  %118 = vmatpush2.msra.mxu0 0.0
  %119 = vmatprep.subr.mxu0 0.0
  %120 = vmatpush2.msra.mxu0 0.0
  %121 = vmatprep.subr.mxu0 0.0
  %122 = vmatpush2.msra.mxu0 0.0
  %123 = vmatprep.mubr.f32.mxu0 0.0
  %124 = vmatmul.mubr.f32.gmra.mxu0 %v57
  %v125 = vpop.f32.mrf.mxu0
  %v126 = vadd.f32 0.0, %v125
  %v127 = vpop.f32.mrf.mxu0
  %128 = vdwg.mxu0
  %v129 = vsub.f32 %v34, %v126
  %v130 = vmul.f32 %v54, %v50
  %vm131 = vcmask 60416
  %v132 = vsel %vm131, %v130, 0.0
  %v133 = vrot.slane %v132, 4
  %v134 = vadd.f32 %v132, %v133
  %v135 = vrot.slane %v134, 2
  %v136 = vadd.f32 %v134, %v135
  %v137 = vrot.slane %v136, 1
  %v138 = vadd.f32 %v136, %v137
  %v139 = vsub.f32 %v129, %v138
  %140 = vst.msk [vmem:[%s7] sm:$0x1] %vm37, %v35
  %v142 = vlaneseq
  %v143 = vshrl.u32 %v142, 7
  %v144 = vsub.s32 0, %v143
  %v145 = vrot.slane %v139, %v144
  %146 = vrot.lane.b32.xlu0 %v145, 8
  %v147 = vpop.permute.xlu0 %146
  %vm149 = vcmask 122944
  %150 = vst.msk [vmem:[%s7] sm:$0x1] %vm149, %v147
  %v151 = vlaneseq
  %v152 = vshrl.u32 %v151, 7
  %v153 = vsub.s32 0, %v152
  %v154 = vrot.slane %v35, %v153
  %155 = vrot.lane.b32.xlu0 %v154, 120
  %v156 = vpop.permute.xlu0 %155
  %vm158 = vcmask 319616
  %159 = vst.msk [vmem:[%s7] sm:$0x1] %vm158, %v156
  %160 = vrot.lane.b32.xlu0 %v154, 32
  %v161 = vpop.permute.xlu0 %160
  %vm163 = vcmask 385344
  %164 = vst.msk [vmem:[%s7] sm:$0x1] %vm163, %v161
  %v165 = vld [vmem:[%s7] sm:$0x1]
  %v167 = vlaneseq
  %v168 = vshrl.u32 %v167, 7
  %v169 = vsub.s32 0, %v168
  %v170 = vrot.slane %v165, %v169
  %v172 = vmul.f32 %v36, %v170
  %v173 = vsel %vm47, %v172, 0.0
  %174 = vadd.xlane.f32.xlu0 %v173
  %v175 = vpop.xlane.xlu0 %174
  %s176 = sld [smem:[#allocation2]]
  %s177 = sadd.s32 %s176, 0
  %s178 = scvt.s32.f32 %s177
  %s179 = sadd.f32 %s178, 1.0
  %v180 = vstv %s179
  %v181 = vrcp.pop %v180
  %s182 = vtos %v181
  %s183 = smul.f32 0.005, %s182
  %v184 = vlaneseq
  %v185 = vand.u32 %v184, 127
  %vm186 = vcmp.ge.s32.totalorder %v185, 8
  %v187 = vsel %vm186, %v165, 0.0
  %s188 = smul.f32 %s183, 2.0
  %v189 = vlaneseq
  %v190 = vshrl.u32 %v189, 7
  %v191 = vsub.s32 0, %v190
  %v192 = vrot.slane %v187, %v191
  %v193 = vmul.f32 %v175, %v192
  %v194 = vstv %s188
  %v195 = vmul.f32 %v194, %v193
  %v196 = vsub.f32 %v36, %v195
  %197 = vst.msk [vmem:[%s6] sm:$0xf] %vm47, %v196
  %198 = vst.msk [vmem:[%s7] sm:$0x1] %vm37, %v34
  // Predicated region
  $region26: #{run.1} parent=0 // pred_check
    _
  $region27: #{run.1} parent=0 // pred_check_branch
    %200 = sbr.rel (0) target = $region29
  $region28: #{run.1} parent=0 // pred_region
    _
  $region29: #{run.1} parent=0 // pred_fallthru
    _
  // Predicated region
  $region30: #{run.1} parent=0 // pred_check
    _
  $region31: #{run.1} parent=0 // pred_check_branch
    %202 = sbr.rel (0) target = $region33
  $region32: #{run.1} parent=0 // pred_region
    _
  $region33: #{run.1} parent=0 // pred_fallthru
    _
  // Predicated region
  $region34: #{run.1} parent=0 // pred_check
    _
  $region35: #{run.1} parent=0 // pred_check_branch
    %204 = sbr.rel (0) target = $region37
  $region36: #{run.1} parent=0 // pred_region
    _
  $region37: #{run.1} parent=0 // pred_fallthru
    _
  // Predicated region
  $region38: #{run.1} parent=0 // pred_check
    _
  $region39: #{run.1} parent=0 // pred_check_branch
    %206 = sbr.rel (0) target = $region41
  $region40: #{run.1} parent=0 // pred_region
    _
  $region41: #{run.1} parent=0 // pred_fallthru
    _
  // Predicated region
  $region42: #{run.1} parent=0 // pred_check
    _
  $region43: #{run.1} parent=0 // pred_check_branch
    %208 = sbr.rel (0) target = $region45
  $region44: #{run.1} parent=0 // pred_region
    _
  $region45: #{run.1} parent=0 // pred_fallthru
    _
  // Predicated region
  $region46: #{run.1} parent=0 // pred_check
    _
  $region47: #{run.1} parent=0 // pred_check_branch
    %210 = sbr.rel (0) target = $region49
  $region48: #{run.1} parent=0 // pred_region
    _
  $region49: #{run.1} parent=0 // pred_fallthru
    _

</llo_original>
